<compile_context>
chip_gen: v7x
topology: tpu7x:2x2x1
jax: 0.10.0
libtpu: 0.0.40
codegen_flags: <defaults>
</compile_context>

<pallas_src>
import functools

import jax
import jax.numpy as jnp
from jax import lax
from jax.experimental import pallas as pl
from jax.experimental.pallas import tpu as pltpu

TEMPERATURE = 0.07
NORMALIZE_EPS = 1e-12          # F.normalize default eps
_INV_EPS = 1.0 / NORMALIZE_EPS
_NEG_LARGE = -1e30             # exp(_NEG_LARGE) underflows to exactly 0.0


def _round_up(x, m):
    return ((x + m - 1) // m) * m


# ---------------------------------------------------------------------------
# Pass 1: one-time row normalization (mem-bound).
#   out = F.normalize(x, dim=1) * sqrt(1/temperature), cast to matmul_dtype.
# ---------------------------------------------------------------------------
def _norm_kernel(x_ref, o_ref, *, scale_const):
    x = x_ref[...].astype(jnp.float32)
    # F.normalize(dim=1): v * min(rsqrt(||v||^2), 1/eps)  (EUP rsqrt, no divide)
    s = jnp.minimum(lax.rsqrt(jnp.sum(x * x, axis=1, keepdims=True)), _INV_EPS)
    o_ref[...] = (x * (s * scale_const)).astype(o_ref.dtype)


# ---------------------------------------------------------------------------
# Pass 2: row-tiled / key-tiled contrastive-loss partial sums.
# grid = (row tiles [parallel], key tiles [arbitrary, innermost]).
# ---------------------------------------------------------------------------
def _make_supcon_kernel(n_true, tq):
    def kernel(q_ref, k_ref, labq_ref, labk_ref, cbias_ref, dbias_ref,
               out_ref, den_ref, num_ref):
        i = pl.program_id(0)            # query row tile
        kk = pl.program_id(1)           # key tile

        @pl.when(kk == 0)
        def _init():
            den_ref[...] = jnp.zeros_like(den_ref)
            num_ref[...] = jnp.zeros_like(num_ref)

        # Similarity already includes 1/temperature (both operands carry
        # sqrt(1/T)); contract the feature axes directly (no transpose).
        sim = lax.dot_general(q_ref[...], k_ref[...], (((1,), (1,)), ((), ())),
                              preferred_element_type=jnp.float32)   # (tq, tq) f32

        # Padded key columns -> -1e30 (exp underflows to exactly 0.0).
        sim = sim + cbias_ref[...]
        # Self-pairs live only in the diagonal block (row tile == key tile):
        # add the resident (tq, tq) diagonal -1e30 bias there.  NOT a den/num
        # subtraction (that would cancel catastrophically).
        sim = sim + dbias_ref[...] * (i == kk).astype(jnp.float32)

        e = jnp.exp(sim)                                            # (tq, tq) f32
        same = labq_ref[...] == labk_ref[...]        # (tq,1)==(1,tq) -> (tq,tq)

        den_ref[...] += jnp.sum(e, axis=1, keepdims=True)
        num_ref[...] += jnp.sum(jnp.where(same, e, 0.0), axis=1, keepdims=True)

        @pl.when(kk == pl.num_programs(1) - 1)
        def _finalize():
            # mean over the (N,N) broadcast of -log(num[None,:]/den) collapses
            # to mean(log den) - mean(log num): 2 logs per row instead of N.
            rows = lax.broadcasted_iota(jnp.int32, (tq, 1), 0) + i * tq
            den = den_ref[...] + 1e-10
            num = num_ref[...] + 1e-10
            contrib = jnp.where(rows < n_true, jnp.log(den) - jnp.log(num), 0.0)
            psum = jnp.sum(contrib, axis=0, keepdims=True)          # (1, 1)
            # Lane-dense partial-sum block; final reduce/mean/clamp in wrapper.
            out_ref[...] = jnp.zeros((8, 128), jnp.float32) + psum

    return kernel


def supcon_loss(embeddings, labels, *, temperature=TEMPERATURE,
                matmul_dtype=jnp.bfloat16, row_tile=256):
    """embeddings: (N, D) float; labels: (N,) int.  Returns scalar f32 loss."""
    n, d = embeddings.shape
    dp = _round_up(d, 128)                              # lane-pad feature dim

    itemsize = jnp.dtype(matmul_dtype).itemsize
    sub = 16 if itemsize == 2 else 8                    # packed-sublane alignment
    if n <= row_tile:
        tq = _round_up(max(n, 1), sub)                  # single tile
    else:
        tq = _round_up(row_tile, 128)                   # lane-aligned label/bias tiles
    n_pad = _round_up(n, tq)
    n_tiles = n_pad // tq

    # Zero padding: zeros normalize to zeros (don't change dot products); padded
    # key columns are removed by the column bias, padded query rows by the
    # rows < n mask at finalize.  Keep the native dtype (upcast happens in-kernel).
    emb = jnp.pad(embeddings, ((0, n_pad - n), (0, dp - d)))
    lab = jnp.pad(labels.astype(jnp.int32), (0, n_pad - n), constant_values=-1)
    lab_q = lab.reshape(n_pad, 1)
    lab_k = lab.reshape(1, n_pad)                       # pre-transposed labels

    col_bias = jnp.where(jnp.arange(n_pad) < n, 0.0, _NEG_LARGE)
    col_bias = col_bias.astype(jnp.float32).reshape(1, n_pad)
    diag_bias = jnp.where(jnp.eye(tq, dtype=bool), _NEG_LARGE, 0.0)
    diag_bias = diag_bias.astype(jnp.float32)

    # ---- pass 1: normalize once (query rows ARE key rows) --------------------
    scale_const = float(1.0 / temperature) ** 0.5
    normed = pl.pallas_call(
        functools.partial(_norm_kernel, scale_const=scale_const),
        out_shape=jax.ShapeDtypeStruct((n_pad, dp), matmul_dtype),
        grid=(n_tiles,),
        in_specs=[pl.BlockSpec((tq, dp), lambda i: (i, 0))],
        out_specs=pl.BlockSpec((tq, dp), lambda i: (i, 0)),
        compiler_params=pltpu.CompilerParams(dimension_semantics=("parallel",)),
    )(emb)

    # ---- pass 2: O(N^2) similarity / loss partial sums -----------------------
    kernel = _make_supcon_kernel(n, tq)

    cost = pl.CostEstimate(
        flops=2 * n_pad * n_pad * dp,
        transcendentals=n_pad * n_pad + 2 * n_pad,
        bytes_accessed=(n_tiles + 1) * n_pad * dp * itemsize + 4 * n_pad * 4,
    )

    # Resident VMEM: q/k tiles (double-buffered), diag bias, (tq,tq) f32
    # temporaries, lane-padded labels / den / num scratch.  Generous headroom,
    # capped at 64 MiB (v7x physical VMEM).
    resident = (4 * tq * dp * itemsize + 2 * tq * tq * 4
                + 10 * tq * tq * 4 + 8 * tq * 128 * 4)
    vmem_limit = int(min(max(2 * resident, 32 << 20), 64 << 20))

    partial_sums = pl.pallas_call(
        kernel,
        out_shape=jax.ShapeDtypeStruct((n_tiles * 8, 128), jnp.float32),
        grid=(n_tiles, n_tiles),
        in_specs=[
            pl.BlockSpec((tq, dp), lambda i, k: (i, 0)),   # query rows (pre-normalized)
            pl.BlockSpec((tq, dp), lambda i, k: (k, 0)),   # key rows (same array)
            pl.BlockSpec((tq, 1), lambda i, k: (i, 0)),    # labels, column form
            pl.BlockSpec((1, tq), lambda i, k: (0, k)),    # labels, row form
            pl.BlockSpec((1, tq), lambda i, k: (0, k)),    # padded-column bias
            pl.BlockSpec((tq, tq), lambda i, k: (0, 0)),   # diag bias (VMEM-resident)
        ],
        out_specs=pl.BlockSpec((8, 128), lambda i, k: (i, 0)),
        scratch_shapes=[pltpu.VMEM((tq, 1), jnp.float32),   # den accumulator
                        pltpu.VMEM((tq, 1), jnp.float32)],  # num accumulator
        compiler_params=pltpu.CompilerParams(
            dimension_semantics=("parallel", "arbitrary"),
            vmem_limit_bytes=vmem_limit,
        ),
        cost_estimate=cost,
    )(normed, normed, lab_q, lab_k, col_bias, diag_bias)

    # Final reduce + mean + clamp (tiny; done in the wrapper so the row axis can
    # stay "parallel" and use both TensorCores on v7x).
    total = jnp.sum(partial_sums[::8, 0])
    return jnp.maximum(total / n, 0.0)


def _supcon_loss_ref(embeddings, labels):
    """Pure-JAX reference mirroring the PyTorch code (broadcast quirk included)."""
    x = embeddings.astype(jnp.float32)
    xn = x / jnp.maximum(jnp.linalg.norm(x, axis=1, keepdims=True), NORMALIZE_EPS)
    sim = (xn @ xn.T) / TEMPERATURE
    e = jnp.exp(sim)
    lab = labels.reshape(-1, 1)
    same = (lab == lab.T).astype(jnp.float32)
    excl = 1.0 - jnp.eye(lab.shape[0], dtype=jnp.float32)
    pos = same * excl
    den = jnp.sum(e * excl, axis=1, keepdims=True) + 1e-10   # (N, 1)
    num = jnp.sum(e * pos, axis=1) + 1e-10                   # (N,)
    loss = jnp.mean(-jnp.log(num / den))                     # broadcasts to (N, N)
    return jnp.maximum(loss, 0.0)


if __name__ == "__main__":
    key = jax.random.PRNGKey(0)
    k_emb, k_lab = jax.random.split(key)

    N, D = 8, 32  # small shapes: batch=8 embeddings of hidden=32
    embeddings = jax.random.normal(k_emb, (N, D), dtype=jnp.float32)
    labels = jax.random.randint(k_lab, (N,), 0, 3, dtype=jnp.int32)

    ref = _supcon_loss_ref(embeddings, labels)

    # Exact path: f32 similarity operands, tight tolerance.
    loss_f32 = supcon_loss(embeddings, labels, matmul_dtype=jnp.float32)
    jax.block_until_ready(loss_f32)
    assert jnp.allclose(loss_f32, ref, rtol=1e-4, atol=1e-4), (loss_f32, ref)

    # Default path: bf16 similarity operands (native MXU on v5e/v6e/v7x);
    # exp/log/normalization stay f32 -> loose tolerance since exp(sim/0.07)
    # amplifies operand rounding.
    loss_bf16 = supcon_loss(embeddings, labels)
    jax.block_until_ready(loss_bf16)
    assert jnp.allclose(loss_bf16, ref, rtol=1e-1, atol=1e-1), (loss_bf16, ref)

    print("KERNEL_OK")
</pallas_src>

<mosaic_0001>
module attributes {stable_mosaic.version = 11 : i64} {
  func.func @_norm_kernel(%arg0: i32, %arg1: memref<8x128xf32, #tpu.memory_space<vmem>>, %arg2: memref<8x128xf32, #tpu.memory_space<vmem>>) attributes {dimension_semantics = [#tpu.dimension_semantics<parallel>], iteration_bounds = array<i64: 1>, scalar_prefetch = 0 : i64, scratch_operands = 0 : i64, tpu.core_type = #tpu.core_type<tc>, window_params = [{transform_indices = @transform_0, window_bounds = array<i64: 8, 128>}, {transform_indices = @transform_1, window_bounds = array<i64: 8, 128>}]} {
    %c0 = arith.constant 0 : index
    %c0_0 = arith.constant 0 : index
    %0 = vector.load %arg1[%c0, %c0_0] : memref<8x128xf32, #tpu.memory_space<vmem>>, vector<8x128xf32>
    %1 = arith.mulf %0, %0 : vector<8x128xf32>
    %cst = arith.constant dense<0.000000e+00> : vector<8xf32>
    %2 = vector.multi_reduction <add>, %1, %cst [1] : vector<8x128xf32> to vector<8xf32>
    %3 = vector.shape_cast %2 : vector<8xf32> to vector<8x1xf32>
    %4 = math.rsqrt %3 : vector<8x1xf32>
    %cst_1 = arith.constant 9.99999995E+11 : f32
    %5 = vector.broadcast %cst_1 : f32 to vector<8x1xf32>
    %6 = arith.minimumf %4, %5 : vector<8x1xf32>
    %cst_2 = arith.constant 3.77964473 : f32
    %7 = vector.broadcast %cst_2 : f32 to vector<8x1xf32>
    %8 = arith.mulf %6, %7 : vector<8x1xf32>
    %9 = vector.broadcast %8 : vector<8x1xf32> to vector<8x128xf32>
    %10 = arith.mulf %0, %9 : vector<8x128xf32>
    %c0_3 = arith.constant 0 : index
    %c0_4 = arith.constant 0 : index
    %11 = vector.load %arg2[%c0_3, %c0_4] : memref<8x128xf32, #tpu.memory_space<vmem>>, vector<8x128xf32>
    tpu.vector_store %arg2[%c0_3, %c0_4], %10 {strides = array<i32>} : memref<8x128xf32, #tpu.memory_space<vmem>>, vector<8x128xf32>,
    return
  }
  func.func @transform_0(%arg0: i32) -> (i32, i32) {
    %c0_i32 = arith.constant 0 : i32
    %c0_i32_0 = arith.constant 0 : i32
    return %arg0, %c0_i32 : i32, i32
  }
  func.func @transform_1(%arg0: i32) -> (i32, i32) {
    %c0_i32 = arith.constant 0 : i32
    %c0_i32_0 = arith.constant 0 : i32
    return %arg0, %c0_i32 : i32, i32
  }
}

</mosaic_0001>

<llo_original>
// kernel: tpu_custom_call.1
$region0: #{tpu_custom_call.1}
  #allocation0 [shape = 'u32[]', space=smem, size = 0x4, offset = 0x4, fixed_abs, tag = 'smem constant byte address 0x4 - core index']
  #allocation1 [shape = 'u32[144,128]{1,0:T(1,128)}', space=vmem, size = 0x12000, scoped, tag = 'internal scratch']
  %s0 = inlined_call_operand.hbm [shape: f32[8,128], index: 0, kind: input, shape index: {}]
  %s1 = inlined_call_operand.hbm [shape: f32[8,128], index: 1, kind: output, shape index: {}]
  %s2 = sld [smem:[#allocation0]]
  $region18: #{tpu_custom_call.1} parent=0
    _
  %s4 = ssub.s32 1, %s2
  %s5 = scalar_select 0, %s4, %s2
  $region1: #{tpu_custom_call.1} parent=0
    #allocation2 [shape = 'u8[4096]{0}', space=vmem, size = 0x1000, scoped, tag = 'input window, operand 0, single buffered']
    #allocation3 [shape = 's32[1]{0}', space=sflag, size = 0x4, scoped, tag = 'scoped memory for tpu_custom_call.1']
    #allocation4 [shape = 's32[1]{0}', space=sflag, size = 0x4, scoped, tag = 'scoped memory for tpu_custom_call.1']
    #allocation5 [shape = 'u8[4096]{0}', space=vmem, size = 0x1000, scoped, tag = 'output window, operand 0, single buffered']
    %6 = vsyncpa [#allocation3], 0
    %7 = vsyncpa [#allocation4], 0
    // Predicated region
    $region2: #{tpu_custom_call.1} parent=1 // pred_check
      _
    $region3: #{tpu_custom_call.1} parent=1 // pred_check_branch
      %9 = sbr.rel (0) target = $region5
    $region4: #{tpu_custom_call.1} parent=1 // pred_region
      %s11 = ssub.s32 128, 128
      %12 = vsyncadd [#allocation3], %s11
      %s14 = sshll.u32 [#allocation2], 4
      %s15 = int_to_ptr.vmem [resolvable:$true] %s14
      %17 = dma.hbm_to_vmem [thread:$0]  %s0, 128, %s15, [#allocation3]
    $region5: #{tpu_custom_call.1} parent=1 // pred_fallthru
      _
    // Predicated region
    $region6: #{tpu_custom_call.1} parent=1 // pred_check
      _
    $region7: #{tpu_custom_call.1} parent=1 // pred_check_branch
      %19 = sbr.rel (0) target = $region9
    $region8: #{tpu_custom_call.1} parent=1 // pred_region
      %20 = dma.done [#allocation3], 128
    $region9: #{tpu_custom_call.1} parent=1 // pred_fallthru
      _
    %v21 = vld [vmem:[#allocation2] sm:$0xff]
    %v22 = vmul.f32 %v21, %v21
    %23 = vadd.xlane.f32.xlu0 %v22
    %v24 = vpop.xlane.xlu0 %23
    %v25 = vrsqrt.pop %v24
    %v26 = vmin.f32 %v25, 1e+12
    %v27 = vmul.f32 %v26, 3.7796447
    %v28 = vmul.f32 %v21, %v27
    %29 = vst [vmem:[#allocation5] sm:$0xff] %v28
    // Predicated region
    $region10: #{tpu_custom_call.1} parent=1 // pred_check
      _
    $region11: #{tpu_custom_call.1} parent=1 // pred_check_branch
      %31 = sbr.rel (0) target = $region13
    $region12: #{tpu_custom_call.1} parent=1 // pred_region
      %s33 = ssub.s32 128, 128
      %34 = vsyncadd [#allocation4], %s33
      %s36 = sshll.u32 [#allocation5], 4
      %s37 = int_to_ptr.vmem [resolvable:$true] %s36
      %39 = dma.vmem_to_hbm [thread:$0]  %s37, 128, %s1, [#allocation4]
    $region13: #{tpu_custom_call.1} parent=1 // pred_fallthru
      _
    // Predicated region
    $region14: #{tpu_custom_call.1} parent=1 // pred_check
      _
    $region15: #{tpu_custom_call.1} parent=1 // pred_check_branch
      %41 = sbr.rel (0) target = $region17
    $region16: #{tpu_custom_call.1} parent=1 // pred_region
      %42 = dma.done [#allocation4], 128
    $region17: #{tpu_custom_call.1} parent=1 // pred_fallthru
      _
    %43 = vsyncpa [#allocation3], 1
    %44 = vsyncpa [#allocation4], 1

</llo_original>
